<compile_context>
chip_gen: v7x
topology: tpu7x:2x2x1
jax: 0.10.0
libtpu: 0.0.40
codegen_flags: <defaults>
</compile_context>

<pallas_src>
import functools

import jax
import jax.numpy as jnp
from jax import lax
from jax.experimental import pallas as pl
from jax.experimental.pallas import tpu as pltpu

EPS = 1e-5

# float32 matches the PyTorch module's numerics. Set to jnp.bfloat16 for ~3x
# MXU throughput / half the input vreg pressure if reduced matmul precision
# is acceptable to the caller (f32 accumulation is kept either way).
MATMUL_DTYPE = jnp.float32


def _stats_kernel(x_ref, w_ref, sum_ref, sq_ref):
    """Pass 1: per-channel sum and sum-of-squares of the 1x1-conv output.

    x_ref:   (1, Cin, T)   pixel tile of one batch image (NCHW slab)
    w_ref:   (Cout, Cin)   1x1 conv weight (resident)
    sum_ref: (Cout, 1)     accumulator (resident across the whole grid)
    sq_ref:  (Cout, 1)     accumulator (resident across the whole grid)
    """
    @pl.when((pl.program_id(0) == 0) & (pl.program_id(1) == 0))
    def _():
        sum_ref[...] = jnp.zeros_like(sum_ref)
        sq_ref[...] = jnp.zeros_like(sq_ref)

    x = x_ref[0].astype(MATMUL_DTYPE)                      # (Cin, T)
    w = w_ref[...].astype(MATMUL_DTYPE)                    # (Cout, Cin)
    y = jnp.dot(w, x, preferred_element_type=jnp.float32)  # (Cout, T), MXU

    # Lane-axis (XLU) reductions -> per-channel partials.
    sum_ref[...] += jnp.sum(y, axis=1, keepdims=True)
    sq_ref[...] += jnp.sum(y * y, axis=1, keepdims=True)


def _norm_kernel(x_ref, w_ref, sum_ref, sq_ref, gamma_ref, beta_ref, o_ref,
                 *, count):
    """Pass 2: recompute conv tile, fused BN (scale/shift FMA) + ReLU.

    o_ref: (1, Cout, T) -- NCHW-contiguous output tile, lane-dense store.
    """
    x = x_ref[0].astype(MATMUL_DTYPE)                      # (Cin, T)
    w = w_ref[...].astype(MATMUL_DTYPE)                    # (Cout, Cin)
    y = jnp.dot(w, x, preferred_element_type=jnp.float32)  # (Cout, T)

    inv_count = 1.0 / count
    mean = sum_ref[...] * inv_count                        # (Cout, 1)
    # Biased variance (matches torch.nn.BatchNorm2d training forward).
    var = sq_ref[...] * inv_count - mean * mean            # (Cout, 1)
    inv_std = lax.rsqrt(var + EPS)                         # EUP
    scale = gamma_ref[...] * inv_std                       # (Cout, 1)
    shift = beta_ref[...] - mean * scale                   # (Cout, 1)

    # Single FMA per element + ReLU; per-channel params broadcast over lanes.
    o_ref[0] = jnp.maximum(y * scale + shift, 0.0).astype(o_ref.dtype)


def _pick_tile(hw, max_tile=2048):
    """Largest multiple-of-128 divisor of hw (<= max_tile), else full extent."""
    best = 0
    t = 128
    while t <= min(hw, max_tile):
        if hw % t == 0:
            best = t
        t += 128
    return best if best else hw  # full-extent lane block is always legal


def conv_bn_relu(x_nchw, weight, gamma, beta):
    """x_nchw: (N, Cin, H, W); weight: (Cout, Cin); gamma/beta: (Cout,)."""
    N, Cin, H, W = x_nchw.shape
    Cout = weight.shape[0]
    HW = H * W
    M = N * HW
    T = _pick_tile(HW)
    grid = (N, HW // T)

    # Free reshapes only (NCHW is contiguous): no HBM transpose traffic.
    x = x_nchw.reshape(N, Cin, HW)
    w = weight.reshape(Cout, Cin)
    g = gamma.reshape(Cout, 1).astype(jnp.float32)
    b = beta.reshape(Cout, 1).astype(jnp.float32)

    x_spec = pl.BlockSpec((1, Cin, T), lambda n, j: (n, 0, j))
    w_spec = pl.BlockSpec((Cout, Cin), lambda n, j: (0, 0))      # resident
    cvec_spec = pl.BlockSpec((Cout, 1), lambda n, j: (0, 0))     # resident

    vmem_limit = 32 * 1024 * 1024  # explicit scoped-VMEM limit (v7x-safe)

    # ---- Pass 1: per-channel batch statistics (reduction over both axes) ----
    ch_sum, ch_sq = pl.pallas_call(
        _stats_kernel,
        out_shape=(jax.ShapeDtypeStruct((Cout, 1), jnp.float32),
                   jax.ShapeDtypeStruct((Cout, 1), jnp.float32)),
        grid=grid,
        in_specs=[x_spec, w_spec],
        out_specs=(cvec_spec, cvec_spec),
        compiler_params=pltpu.CompilerParams(
            dimension_semantics=("arbitrary", "arbitrary"),
            vmem_limit_bytes=vmem_limit),
    )(x, w)

    # ---- Pass 2: conv + normalize (scale/shift) + ReLU, fully parallel ----
    out = pl.pallas_call(
        functools.partial(_norm_kernel, count=float(M)),
        out_shape=jax.ShapeDtypeStruct((N, Cout, HW), jnp.float32),
        grid=grid,
        in_specs=[x_spec, w_spec, cvec_spec, cvec_spec, cvec_spec, cvec_spec],
        out_specs=pl.BlockSpec((1, Cout, T), lambda n, j: (n, 0, j)),
        compiler_params=pltpu.CompilerParams(
            dimension_semantics=("parallel", "parallel"),
            vmem_limit_bytes=vmem_limit),
    )(x, w, ch_sum, ch_sq, g, b)

    return out.reshape(N, Cout, H, W)


def reference(x_nchw, weight, gamma, beta):
    """Pure-JAX reference (NCHW) for correctness check."""
    N, Cin, H, W = x_nchw.shape
    Cout = weight.shape[0]
    xf = x_nchw.reshape(N, Cin, H * W)
    y = jnp.einsum('oc,ncp->nop', weight, xf,
                   precision=lax.Precision.HIGHEST)          # (N, Cout, HW)
    mean = jnp.mean(y, axis=(0, 2), keepdims=True)
    var = jnp.mean((y - mean) ** 2, axis=(0, 2), keepdims=True)
    yh = (y - mean) / jnp.sqrt(var + EPS) * gamma.reshape(1, Cout, 1) \
        + beta.reshape(1, Cout, 1)
    return jnp.maximum(yh, 0.0).reshape(N, Cout, H, W)


if __name__ == "__main__":
    # Cin=64, Cout=144 are fixed by the Conv2d; batch/spatial shrunk from the
    # module's (1, 64, 56, 56) to a small shape for the check.
    N, Cin, Cout, H, W = 2, 64, 144, 16, 16

    key = jax.random.PRNGKey(0)
    kx, kw, kg, kb = jax.random.split(key, 4)

    x = jax.random.normal(kx, (N, Cin, H, W), dtype=jnp.float32)
    # Conv2d weight (Cout, Cin, 1, 1) -> (Cout, Cin).
    weight = jax.random.normal(kw, (Cout, Cin), dtype=jnp.float32) * 0.05
    # Non-default BN affine params to exercise the affine path.
    gamma = 1.0 + 0.1 * jax.random.normal(kg, (Cout,), dtype=jnp.float32)
    beta = 0.1 * jax.random.normal(kb, (Cout,), dtype=jnp.float32)

    out = jax.block_until_ready(conv_bn_relu(x, weight, gamma, beta))
    ref = jax.block_until_ready(reference(x, weight, gamma, beta))

    assert out.shape == (N, Cout, H, W)
    assert jnp.allclose(out, ref, atol=1e-4, rtol=1e-4)

    # TODO(synk): BatchNorm2d's running_mean/running_var momentum update is a
    # training-time buffer side effect that does not affect this forward output.

    print("KERNEL_OK")
</pallas_src>

<mosaic_0001>
module attributes {stable_mosaic.version = 11 : i64} {
  func.func @_stats_kernel(%arg0: i32, %arg1: i32, %arg2: memref<1x64x256xf32, #tpu.memory_space<vmem>>, %arg3: memref<144x64xf32, #tpu.memory_space<vmem>>, %arg4: memref<144x1xf32, #tpu.memory_space<vmem>>, %arg5: memref<144x1xf32, #tpu.memory_space<vmem>>) attributes {dimension_semantics = [#tpu.dimension_semantics<arbitrary>, #tpu.dimension_semantics<arbitrary>], iteration_bounds = array<i64: 2, 1>, scalar_prefetch = 0 : i64, scratch_operands = 0 : i64, tpu.core_type = #tpu.core_type<tc>, window_params = [{transform_indices = @transform_0, window_bounds = array<i64: 1, 64, 256>}, {pipeline_mode = #tpu.pipeline_mode<synchronous>, transform_indices = @transform_1, window_bounds = array<i64: 144, 64>}, {pipeline_mode = #tpu.pipeline_mode<synchronous>, transform_indices = @transform_2, window_bounds = array<i64: 144, 1>}, {pipeline_mode = #tpu.pipeline_mode<synchronous>, transform_indices = @transform_3, window_bounds = array<i64: 144, 1>}]} {
    %c0_i32 = arith.constant 0 : i32
    %0 = arith.cmpi eq, %arg0, %c0_i32 : i32
    %c0_i32_0 = arith.constant 0 : i32
    %1 = arith.cmpi eq, %arg1, %c0_i32_0 : i32
    %2 = arith.andi %0, %1 : i1
    %3 = arith.extui %2 : i1 to i32
    %c0_i32_1 = arith.constant 0 : i32
    %4 = arith.cmpi ne, %3, %c0_i32_1 : i32
    scf.if %4 {
      %cst_16 = arith.constant 0.000000e+00 : f32
      %20 = vector.broadcast %cst_16 : f32 to vector<144x1xf32>
      %c0_17 = arith.constant 0 : index
      %c0_18 = arith.constant 0 : index
      %21 = vector.load %arg4[%c0_17, %c0_18] : memref<144x1xf32, #tpu.memory_space<vmem>>, vector<144x1xf32>
      tpu.vector_store %arg4[%c0_17, %c0_18], %20 {strides = array<i32>} : memref<144x1xf32, #tpu.memory_space<vmem>>, vector<144x1xf32>,
      %cst_19 = arith.constant 0.000000e+00 : f32
      %22 = vector.broadcast %cst_19 : f32 to vector<144x1xf32>
      %c0_20 = arith.constant 0 : index
      %c0_21 = arith.constant 0 : index
      %23 = vector.load %arg5[%c0_20, %c0_21] : memref<144x1xf32, #tpu.memory_space<vmem>>, vector<144x1xf32>
      tpu.vector_store %arg5[%c0_20, %c0_21], %22 {strides = array<i32>} : memref<144x1xf32, #tpu.memory_space<vmem>>, vector<144x1xf32>,
    } else {
    }
    %c0 = arith.constant 0 : index
    %c0_2 = arith.constant 0 : index
    %c0_3 = arith.constant 0 : index
    %5 = vector.load %arg2[%c0, %c0_2, %c0_3] : memref<1x64x256xf32, #tpu.memory_space<vmem>>, vector<1x64x256xf32>
    %6 = vector.shape_cast %5 : vector<1x64x256xf32> to vector<64x256xf32>
    %c0_4 = arith.constant 0 : index
    %c0_5 = arith.constant 0 : index
    %7 = vector.load %arg3[%c0_4, %c0_5] : memref<144x64xf32, #tpu.memory_space<vmem>>, vector<144x64xf32>
    %cst = arith.constant dense<0.000000e+00> : vector<144x256xf32>
    %8 = tpu.matmul %7, %6, %cst {dimension_numbers = #tpu.dot_dimension_numbers<[1], [0], [0], [1], [0, 0, 1, 1], [], []>} : vector<144x64xf32>, vector<64x256xf32>, vector<144x256xf32> -> vector<144x256xf32>
    %c0_6 = arith.constant 0 : index
    %c0_7 = arith.constant 0 : index
    %9 = vector.load %arg4[%c0_6, %c0_7] : memref<144x1xf32, #tpu.memory_space<vmem>>, vector<144x1xf32>
    %cst_8 = arith.constant dense<0.000000e+00> : vector<144xf32>
    %10 = vector.multi_reduction <add>, %8, %cst_8 [1] : vector<144x256xf32> to vector<144xf32>
    %11 = vector.shape_cast %10 : vector<144xf32> to vector<144x1xf32>
    %12 = arith.addf %9, %11 : vector<144x1xf32>
    %c0_9 = arith.constant 0 : index
    %c0_10 = arith.constant 0 : index
    %13 = vector.load %arg4[%c0_9, %c0_10] : memref<144x1xf32, #tpu.memory_space<vmem>>, vector<144x1xf32>
    tpu.vector_store %arg4[%c0_9, %c0_10], %12 {strides = array<i32>} : memref<144x1xf32, #tpu.memory_space<vmem>>, vector<144x1xf32>,
    %c0_11 = arith.constant 0 : index
    %c0_12 = arith.constant 0 : index
    %14 = vector.load %arg5[%c0_11, %c0_12] : memref<144x1xf32, #tpu.memory_space<vmem>>, vector<144x1xf32>
    %15 = arith.mulf %8, %8 : vector<144x256xf32>
    %cst_13 = arith.constant dense<0.000000e+00> : vector<144xf32>
    %16 = vector.multi_reduction <add>, %15, %cst_13 [1] : vector<144x256xf32> to vector<144xf32>
    %17 = vector.shape_cast %16 : vector<144xf32> to vector<144x1xf32>
    %18 = arith.addf %14, %17 : vector<144x1xf32>
    %c0_14 = arith.constant 0 : index
    %c0_15 = arith.constant 0 : index
    %19 = vector.load %arg5[%c0_14, %c0_15] : memref<144x1xf32, #tpu.memory_space<vmem>>, vector<144x1xf32>
    tpu.vector_store %arg5[%c0_14, %c0_15], %18 {strides = array<i32>} : memref<144x1xf32, #tpu.memory_space<vmem>>, vector<144x1xf32>,
    return
  }
  func.func @transform_0(%arg0: i32, %arg1: i32) -> (i32, i32, i32) {
    %c0_i32 = arith.constant 0 : i32
    %c0_i32_0 = arith.constant 0 : i32
    return %arg0, %c0_i32, %arg1 : i32, i32, i32
  }
  func.func @transform_1(%arg0: i32, %arg1: i32) -> (i32, i32) {
    %c0_i32 = arith.constant 0 : i32
    %c0_i32_0 = arith.constant 0 : i32
    %c0_i32_1 = arith.constant 0 : i32
    return %c0_i32, %c0_i32_0 : i32, i32
  }
  func.func @transform_2(%arg0: i32, %arg1: i32) -> (i32, i32) {
    %c0_i32 = arith.constant 0 : i32
    %c0_i32_0 = arith.constant 0 : i32
    %c0_i32_1 = arith.constant 0 : i32
    return %c0_i32, %c0_i32_0 : i32, i32
  }
  func.func @transform_3(%arg0: i32, %arg1: i32) -> (i32, i32) {
    %c0_i32 = arith.constant 0 : i32
    %c0_i32_0 = arith.constant 0 : i32
    %c0_i32_1 = arith.constant 0 : i32
    return %c0_i32, %c0_i32_0 : i32, i32
  }
}

</mosaic_0001>

<llo_original>
// kernel: tpu_custom_call.1
$region0: #{tpu_custom_call.1}
  #allocation0 [shape = 'u32[]', space=smem, size = 0x4, offset = 0x4, fixed_abs, tag = 'smem constant byte address 0x4 - core index']
  #allocation1 [shape = 'u32[144,128]{1,0:T(1,128)}', space=vmem, size = 0x12000, scoped, tag = 'internal scratch']
  %s0 = inlined_call_operand.vmem [shape: f32[2,64,256], index: 0, kind: input, shape index: {}]
  %s1 = inlined_call_operand.vmem [shape: f32[144,64], index: 1, kind: input, shape index: {}]
  %s2 = inlined_call_operand.vmem [shape: f32[144,1], index: 2, kind: output, shape index: {0}]
  %s3 = inlined_call_operand.vmem [shape: f32[144,1], index: 3, kind: output, shape index: {1}]
  %4 = xla_tuple %s2, %s3
  %s5 = sld [smem:[#allocation0]]
  $region53: #{tpu_custom_call.1} parent=0
    _
  %s7 = ssub.s32 1, %s5
  %s8 = scalar_select 0, %s7, %s5
  loop: start=0, step=1, limit=4
  $region2: #{tpu_custom_call.1} parent=0 // loop_pre_header
    _
  $region3: #{tpu_custom_call.1} parent=0 // loop_header
    %s10 = sphi 0, %s14
    %p11 = scmp.ge.s32.totalorder %s10, 4
    %s17 = sphi 0, %s29
    %s18 = sphi 0, %s25
    %s19 = sphi 0, %s17
    %s20 = sphi 0, %s18
    %s21 = sphi 0, %s19
    %s22 = sphi 0, %s20
    %s34 = sphi 0, %s36
    %s37 = sphi 0, %s34
    %s38 = sphi 0, %s37
    %s54 = sphi 0, %s38
    %s58 = sphi 0, %s58
    %s60 = sphi 0, %s58
    %s61 = sphi 0, %s60
    %s75 = sphi 0, %s61
    %s79 = sphi 0, %s79
    %s81 = sphi 0, %s79
    %s82 = sphi 0, %s81
    %s96 = sphi 0, %s82
    %s100 = sphi 0, %s100
    %s102 = sphi 0, %s100
    %s103 = sphi 0, %s102
    %s117 = sphi 0, %s103
  $region4: #{tpu_custom_call.1} parent=0 // loop_header_branch
    %13 = sbr.rel (%p11) target = $region8
  $region5: #{tpu_custom_call.1} parent=0 // loop_body
    %s15 = ssub.s32 %s10, 1
    %s16 = ssub.s32 %s10, 2
    %s23 = sadd.s32 1, %s18
    %p24 = scmp.ge.s32.totalorder %s23, 1
    %s25 = scalar_select %p24, 0, %s23
    %s26 = sadd.s32 1, %s17
    %s27 = scalar_select %p24, %s26, %s17
    %p28 = scmp.ge.s32.totalorder %s27, 2
    %s29 = scalar_select %p28, 0, %s27
    %s30 = ssub.s32 %s17, %s29
    %s31 = ssub.s32 %s18, %s25
    %s32 = sor.u32 %s30, %s31
    %p33 = scmp.eq.s32.totalorder %s32, 0
    %s35 = sadd.s32 %s34, 1
    %s36 = scalar_select %p33, %s34, %s35
    %p39 = pneg %p33
    %p40 = scmp.eq.s32.totalorder %s10, 1
    %p41 = por %p39, %p40
    %p42 = scmp.ne.s32.totalorder %s34, %s37
    %p43 = scmp.eq.s32.totalorder %s10, 0
    %p44 = por %p42, %p43
    %p45 = scmp.ne.s32.totalorder %s34, %s37
    %p46 = scmp.eq.s32.totalorder %s15, 1
    %p47 = por %p45, %p46
    %p48 = scmp.ne.s32.totalorder %s37, %s38
    %p49 = scmp.eq.s32.totalorder %s15, 0
    %p50 = por %p48, %p49
    %p51 = scmp.ne.s32.totalorder %s37, %s38
    %p52 = scmp.eq.s32.totalorder %s16, 1
    %p53 = por %p51, %p52
    %p55 = scmp.ne.s32.totalorder %s38, %s54
    %p56 = scmp.eq.s32.totalorder %s16, 0
    %p57 = por %p55, %p56
    %s59 = sadd.s32 %s58, 1
    %p62 = scmp.eq.s32.totalorder %s10, 1
    %p63 = scmp.ne.s32.totalorder %s58, %s60
    %p64 = scmp.eq.s32.totalorder %s10, 0
    %p65 = por %p63, %p64
    %p66 = scmp.ne.s32.totalorder %s58, %s60
    %p67 = scmp.eq.s32.totalorder %s15, 1
    %p68 = por %p66, %p67
    %p69 = scmp.ne.s32.totalorder %s60, %s61
    %p70 = scmp.eq.s32.totalorder %s15, 0
    %p71 = por %p69, %p70
    %p72 = scmp.ne.s32.totalorder %s60, %s61
    %p73 = scmp.eq.s32.totalorder %s16, 1
    %p74 = por %p72, %p73
    %p76 = scmp.ne.s32.totalorder %s61, %s75
    %p77 = scmp.eq.s32.totalorder %s16, 0
    %p78 = por %p76, %p77
    %s80 = sadd.s32 %s79, 1
    %p83 = scmp.eq.s32.totalorder %s10, 1
    %p84 = scmp.ne.s32.totalorder %s79, %s81
    %p85 = scmp.eq.s32.totalorder %s10, 0
    %p86 = por %p84, %p85
    %p87 = scmp.ne.s32.totalorder %s79, %s81
    %p88 = scmp.eq.s32.totalorder %s15, 1
    %p89 = por %p87, %p88
    %p90 = scmp.ne.s32.totalorder %s81, %s82
    %p91 = scmp.eq.s32.totalorder %s15, 0
    %p92 = por %p90, %p91
    %p93 = scmp.ne.s32.totalorder %s81, %s82
    %p94 = scmp.eq.s32.totalorder %s16, 1
    %p95 = por %p93, %p94
    %p97 = scmp.ne.s32.totalorder %s82, %s96
    %p98 = scmp.eq.s32.totalorder %s16, 0
    %p99 = por %p97, %p98
    %s101 = sadd.s32 %s100, 1
    %p104 = scmp.eq.s32.totalorder %s10, 1
    %p105 = scmp.ne.s32.totalorder %s100, %s102
    %p106 = scmp.eq.s32.totalorder %s10, 0
    %p107 = por %p105, %p106
    %p108 = scmp.ne.s32.totalorder %s100, %s102
    %p109 = scmp.eq.s32.totalorder %s15, 1
    %p110 = por %p108, %p109
    %p111 = scmp.ne.s32.totalorder %s102, %s103
    %p112 = scmp.eq.s32.totalorder %s15, 0
    %p113 = por %p111, %p112
    %p114 = scmp.ne.s32.totalorder %s102, %s103
    %p115 = scmp.eq.s32.totalorder %s16, 1
    %p116 = por %p114, %p115
    %p118 = scmp.ne.s32.totalorder %s103, %s117
    %p119 = scmp.eq.s32.totalorder %s16, 0
    %p120 = por %p118, %p119
    %p121 = scmp.le.s32.totalorder 1, %s10
    %p122 = scmp.lt.s32.totalorder %s10, 3
    %p123 = pnand %p121, %p122
    %p124 = pneg %p123
    // Predicated region
    $region9: #{tpu_custom_call.1} parent=5 // pred_check
      _
    $region10: #{tpu_custom_call.1} parent=5 // pred_check_branch
      %126 = sbr.rel (%p123) target = $region12
    $region11: #{tpu_custom_call.1} parent=5 // pred_region
      %s127 = ssub.s32 %s10, 1
      // Predicated region
      $region13: #{tpu_custom_call.1} parent=11 // pred_check
        %p128 = pneg %p71
      $region14: #{tpu_custom_call.1} parent=11 // pred_check_branch
        %130 = sbr.rel (%p128) target = $region16
      $region15: #{tpu_custom_call.1} parent=11 // pred_region
        _
      $region16: #{tpu_custom_call.1} parent=11 // pred_fallthru
        _
    $region12: #{tpu_custom_call.1} parent=5 // pred_fallthru
      _
    %p131 = scmp.lt.s32.totalorder %s10, 2
    // Predicated region
    $region17: #{tpu_custom_call.1} parent=5 // pred_check
      %p132 = pneg %p131
    $region18: #{tpu_custom_call.1} parent=5 // pred_check_branch
      %134 = sbr.rel (%p132) target = $region20
    $region19: #{tpu_custom_call.1} parent=5 // pred_region
      // Predicated region
      $region21: #{tpu_custom_call.1} parent=19 // pred_check
        %p135 = pneg %p44
      $region22: #{tpu_custom_call.1} parent=19 // pred_check_branch
        %137 = sbr.rel (%p135) target = $region24
      $region23: #{tpu_custom_call.1} parent=19 // pred_region
        %s138 = smul.u32 2, %s18
        %p139 = scmp.lt.s32.totalorder %s17, 1
        %s140 = scalar_select %p139, %s17, 1
        %p141 = scmp.lt.s32.totalorder %s138, 1
        %s142 = scalar_select %p141, %s138, 1
        %s143 = smul.addr %s140, 16
        %s144 = sadd.s32 %s142, %s143
        %s145 = smul.addr %s144, 8
        %s146 = scalar_lea.vmem %s0, %s145
        %s147 = smul.u32 2, %s18
      $region24: #{tpu_custom_call.1} parent=19 // pred_fallthru
        _
    $region20: #{tpu_custom_call.1} parent=5 // pred_fallthru
      _
    %p148 = scmp.le.s32.totalorder 1, %s10
    %p149 = scmp.lt.s32.totalorder %s10, 3
    %p150 = pnand %p148, %p149
    %p151 = pneg %p150
    // Predicated region
    $region25: #{tpu_custom_call.1} parent=5 // pred_check
      _
    $region26: #{tpu_custom_call.1} parent=5 // pred_check_branch
      %153 = sbr.rel (%p150) target = $region28
    $region27: #{tpu_custom_call.1} parent=5 // pred_region
      %s154 = ssub.s32 %s10, 1
      %s155 = smul.u32 2, %s20
      %p156 = scmp.lt.s32.totalorder %s19, 1
      %s157 = scalar_select %p156, %s19, 1
      %p158 = scmp.lt.s32.totalorder %s155, 1
      %s159 = scalar_select %p158, %s155, 1
      %s160 = smul.addr %s157, 16
      %s161 = sadd.s32 %s159, %s160
      %s162 = smul.addr %s161, 8
      %s163 = scalar_lea.vmem %s0, %s162
      %p164 = pneg %p50
      %p165 = pneg %p47
      %p166 = pneg %p71
      %p167 = pneg %p68
      %p168 = pneg %p92
      %p169 = pneg %p89
      %p170 = pneg %p113
      %p171 = pneg %p110
      %s172 = smul.u32 2, %s20
      %p173 = scmp.lt.s32.totalorder %s19, 1
      %s174 = scalar_select %p173, %s19, 1
      %p175 = scmp.lt.s32.totalorder %s172, 1
      %s176 = scalar_select %p175, %s172, 1
      %s177 = smul.addr %s174, 16
      %s178 = sadd.s32 %s176, %s177
      %s179 = smul.addr %s178, 8
      %s180 = scalar_lea.vmem %s0, %s179
      %s181 = smul.u32 2, %s20
      %p182 = scmp.eq.s32.totalorder %s19, 0
      %p183 = scmp.eq.s32.totalorder %s20, 0
      %p184 = pnand %p182, %p183
      %p185 = pneg %p184
      // Predicated region
      $region29: #{tpu_custom_call.1} parent=27 // pred_check
        _
      $region30: #{tpu_custom_call.1} parent=27 // pred_check_branch
        %187 = sbr.rel (%p184) target = $region32
      $region31: #{tpu_custom_call.1} parent=27 // pred_region
        %vm188 = vcmask 7168
        %189 = vst.msk [vmem:[%s2] sm:$0xff] %vm188, 0.0
        %190 = vst.msk [vmem:[%s2 + $0x8] sm:$0xff] %vm188, 0.0
        %191 = vst.msk [vmem:[%s2 + $0x10] sm:$0xff] %vm188, 0.0
        %192 = vst.msk [vmem:[%s2 + $0x18] sm:$0xff] %vm188, 0.0
        %193 = vst.msk [vmem:[%s2 + $0x20] sm:$0xff] %vm188, 0.0
        %194 = vst.msk [vmem:[%s2 + $0x28] sm:$0xff] %vm188, 0.0
        %195 = vst.msk [vmem:[%s2 + $0x30] sm:$0xff] %vm188, 0.0
        %196 = vst.msk [vmem:[%s2 + $0x38] sm:$0xff] %vm188, 0.0
        %197 = vst.msk [vmem:[%s2 + $0x40] sm:$0xff] %vm188, 0.0
        %198 = vst.msk [vmem:[%s2 + $0x48] sm:$0xff] %vm188, 0.0
        %199 = vst.msk [vmem:[%s2 + $0x50] sm:$0xff] %vm188, 0.0
        %200 = vst.msk [vmem:[%s2 + $0x58] sm:$0xff] %vm188, 0.0
        %201 = vst.msk [vmem:[%s2 + $0x60] sm:$0xff] %vm188, 0.0
        %202 = vst.msk [vmem:[%s2 + $0x68] sm:$0xff] %vm188, 0.0
        %203 = vst.msk [vmem:[%s2 + $0x70] sm:$0xff] %vm188, 0.0
        %204 = vst.msk [vmem:[%s2 + $0x78] sm:$0xff] %vm188, 0.0
        %205 = vst.msk [vmem:[%s2 + $0x80] sm:$0xff] %vm188, 0.0
        %206 = vst.msk [vmem:[%s2 + $0x88] sm:$0xff] %vm188, 0.0
        %207 = vst.msk [vmem:[%s3] sm:$0xff] %vm188, 0.0
        %208 = vst.msk [vmem:[%s3 + $0x8] sm:$0xff] %vm188, 0.0
        %209 = vst.msk [vmem:[%s3 + $0x10] sm:$0xff] %vm188, 0.0
        %210 = vst.msk [vmem:[%s3 + $0x18] sm:$0xff] %vm188, 0.0
        %211 = vst.msk [vmem:[%s3 + $0x20] sm:$0xff] %vm188, 0.0
        %212 = vst.msk [vmem:[%s3 + $0x28] sm:$0xff] %vm188, 0.0
        %213 = vst.msk [vmem:[%s3 + $0x30] sm:$0xff] %vm188, 0.0
        %214 = vst.msk [vmem:[%s3 + $0x38] sm:$0xff] %vm188, 0.0
        %215 = vst.msk [vmem:[%s3 + $0x40] sm:$0xff] %vm188, 0.0
        %216 = vst.msk [vmem:[%s3 + $0x48] sm:$0xff] %vm188, 0.0
        %217 = vst.msk [vmem:[%s3 + $0x50] sm:$0xff] %vm188, 0.0
        %218 = vst.msk [vmem:[%s3 + $0x58] sm:$0xff] %vm188, 0.0
        %219 = vst.msk [vmem:[%s3 + $0x60] sm:$0xff] %vm188, 0.0
        %220 = vst.msk [vmem:[%s3 + $0x68] sm:$0xff] %vm188, 0.0
        %221 = vst.msk [vmem:[%s3 + $0x70] sm:$0xff] %vm188, 0.0
        %222 = vst.msk [vmem:[%s3 + $0x78] sm:$0xff] %vm188, 0.0
        %223 = vst.msk [vmem:[%s3 + $0x80] sm:$0xff] %vm188, 0.0
        %224 = vst.msk [vmem:[%s3 + $0x88] sm:$0xff] %vm188, 0.0
      $region32: #{tpu_custom_call.1} parent=27 // pred_fallthru
        _
      %v225 = vld [vmem:[%s180] sm:$0xff]
      %v226 = vld [vmem:[%s180 + $0x8] sm:$0xff]
      %v227 = vld [vmem:[%s180 + $0x10] sm:$0xff]
      %v228 = vld [vmem:[%s180 + $0x18] sm:$0xff]
      %v229 = vld [vmem:[%s180 + $0x20] sm:$0xff]
      %v230 = vld [vmem:[%s180 + $0x28] sm:$0xff]
      %v231 = vld [vmem:[%s180 + $0x30] sm:$0xff]
      %v232 = vld [vmem:[%s180 + $0x38] sm:$0xff]
      %v233 = vld [vmem:[%s180 + $0x40] sm:$0xff]
      %v234 = vld [vmem:[%s180 + $0x48] sm:$0xff]
      %v235 = vld [vmem:[%s180 + $0x50] sm:$0xff]
      %v236 = vld [vmem:[%s180 + $0x58] sm:$0xff]
      %v237 = vld [vmem:[%s180 + $0x60] sm:$0xff]
      %v238 = vld [vmem:[%s180 + $0x68] sm:$0xff]
      %v239 = vld [vmem:[%s180 + $0x70] sm:$0xff]
      %v240 = vld [vmem:[%s180 + $0x78] sm:$0xff]
      %v241 = vld [vmem:[%s1] sm:$0xff]
      %v242 = vld [vmem:[%s1 + $0x8] sm:$0xff]
      %v243 = vld [vmem:[%s1 + $0x10] sm:$0xff]
      %v244 = vld [vmem:[%s1 + $0x18] sm:$0xff]
      %v245 = vld [vmem:[%s1 + $0x20] sm:$0xff]
      %v246 = vld [vmem:[%s1 + $0x28] sm:$0xff]
      %v247 = vld [vmem:[%s1 + $0x30] sm:$0xff]
      %v248 = vld [vmem:[%s1 + $0x38] sm:$0xff]
      %v249 = vld [vmem:[%s1 + $0x40] sm:$0xff]
      %v250 = vld [vmem:[%s1 + $0x48] sm:$0xff]
      %v251 = vld [vmem:[%s1 + $0x50] sm:$0xff]
      %v252 = vld [vmem:[%s1 + $0x58] sm:$0xff]
      %v253 = vld [vmem:[%s1 + $0x60] sm:$0xff]
      %v254 = vld [vmem:[%s1 + $0x68] sm:$0xff]
      %v255 = vld [vmem:[%s1 + $0x70] sm:$0xff]
      %v256 = vld [vmem:[%s1 + $0x78] sm:$0xff]
      %v257 = vld [vmem:[%s1 + $0x80] sm:$0xff]
      %v258 = vld [vmem:[%s1 + $0x88] sm:$0xff]
      %vm259 = vcmask 523264
      %v261 = vsel %vm259, %v241, 0
      %v264 = vsel %vm259, %v242, 0
      %v267 = vsel %vm259, %v243, 0
      %v270 = vsel %vm259, %v244, 0
      %v273 = vsel %vm259, %v245, 0
      %v276 = vsel %vm259, %v246, 0
      %v279 = vsel %vm259, %v247, 0
      %v282 = vsel %vm259, %v248, 0
      %v285 = vsel %vm259, %v249, 0
      %v288 = vsel %vm259, %v250, 0
      %v291 = vsel %vm259, %v251, 0
      %v294 = vsel %vm259, %v252, 0
      %v297 = vsel %vm259, %v253, 0
      %v300 = vsel %vm259, %v254, 0
      %v303 = vsel %vm259, %v255, 0
      %v306 = vsel %vm259, %v256, 0
      %v309 = vsel %vm259, %v257, 0
      %v312 = vsel %vm259, %v258, 0
      %314 = vmatprep.subr.mxu0 %v226
      %315 = vmatpush1.msra.mxu0 %v225
      %316 = vmatprep.subr.mxu0 %v228
      %317 = vmatpush1.msra.mxu0 %v227
      %318 = vmatprep.subr.mxu0 %v230
      %319 = vmatpush1.msra.mxu0 %v229
      %320 = vmatprep.subr.mxu0 %v232
      %321 = vmatpush1.msra.mxu0 %v231
      %322 = vmatprep.subr.mxu0 %v234
      %323 = vmatpush1.msra.mxu0 %v233
      %324 = vmatprep.subr.mxu0 %v236
      %325 = vmatpush1.msra.mxu0 %v235
      %326 = vmatprep.subr.mxu0 %v238
      %327 = vmatpush1.msra.mxu0 %v237
      %328 = vmatprep.subr.mxu0 %v240
      %329 = vmatpush1.msra.mxu0 %v239
      %330 = vmatprep.subr.mxu0 0.0
      %331 = vmatpush1.msra.mxu0 0.0
      %332 = vmatprep.subr.mxu0 0.0
      %333 = vmatpush1.msra.mxu0 0.0
      %334 = vmatprep.subr.mxu0 0.0
      %335 = vmatpush1.msra.mxu0 0.0
      %336 = vmatprep.subr.mxu0 0.0
      %337 = vmatpush1.msra.mxu0 0.0
      %338 = vmatprep.subr.mxu0 0.0
      %339 = vmatpush1.msra.mxu0 0.0
      %340 = vmatprep.subr.mxu0 0.0
      %341 = vmatpush1.msra.mxu0 0.0
      %342 = vmatprep.subr.mxu0 0.0
      %343 = vmatpush1.msra.mxu0 0.0
      %344 = vmatprep.subr.mxu0 0.0
      %345 = vmatpush1.msra.mxu0 0.0
      %346 = vmatprep.subr.mxu0 0.0
      %347 = vmatpush1.msra.mxu0 0.0
      %348 = vmatprep.subr.mxu0 0.0
      %349 = vmatpush1.msra.mxu0 0.0
      %350 = vmatprep.subr.mxu0 0.0
      %351 = vmatpush1.msra.mxu0 0.0
      %352 = vmatprep.subr.mxu0 0.0
      %353 = vmatpush1.msra.mxu0 0.0
      %354 = vmatprep.subr.mxu0 0.0
      %355 = vmatpush1.msra.mxu0 0.0
      %356 = vmatprep.subr.mxu0 0.0
      %357 = vmatpush1.msra.mxu0 0.0
      %358 = vmatprep.subr.mxu0 0.0
      %359 = vmatpush1.msra.mxu0 0.0
      %360 = vmatprep.subr.mxu0 0.0
      %361 = vmatpush1.msra.mxu0 0.0
      %362 = vmatprep.subr.mxu0 0.0
      %363 = vmatpush1.msra.mxu0 0.0
      %364 = vmatprep.subr.mxu0 0.0
      %365 = vmatpush1.msra.mxu0 0.0
      %366 = vmatprep.subr.mxu0 0.0
      %367 = vmatpush1.msra.mxu0 0.0
      %368 = vmatprep.subr.mxu0 0.0
      %369 = vmatpush1.msra.mxu0 0.0
      %370 = vmatprep.subr.mxu0 0.0
      %371 = vmatpush1.msra.mxu0 0.0
      %372 = vmatprep.subr.mxu0 0.0
      %373 = vmatpush1.msra.mxu0 0.0
      %374 = vmatprep.subr.mxu0 0.0
      %375 = vmatpush1.msra.mxu0 0.0
      %376 = vmatprep.subr.mxu0 0.0
      %377 = vmatpush1.msra.mxu0 0.0
      %378 = vmatprep.mubr.f32.mxu0 0.0
      %379 = vmatmul.mubr.f32.gmra.mrb[0].mxu0 %v261
      %v380 = vpop.f32.mrb[0].mxu0
      %v381 = vadd.f32 0.0, %v380
      %v382 = vpop.f32.mrb[0].mxu0
      %v383 = vadd.f32 0.0, %v382
      %384 = vmatprep.mubr.f32.mxu0 0.0
      %385 = vmatmul.mubr.f32.gmra.mrb[0].mxu0 %v264
      %v386 = vpop.f32.mrb[0].mxu0
      %v387 = vadd.f32 0.0, %v386
      %v388 = vpop.f32.mrb[0].mxu0
      %v389 = vadd.f32 0.0, %v388
      %390 = vmatprep.mubr.f32.mxu0 0.0
      %391 = vmatmul.mubr.f32.gmra.mrb[0].mxu0 %v267
      %v392 = vpop.f32.mrb[0].mxu0
      %v393 = vadd.f32 0.0, %v392
      %v394 = vpop.f32.mrb[0].mxu0
      %v395 = vadd.f32 0.0, %v394
      %396 = vmatprep.mubr.f32.mxu0 0.0
      %397 = vmatmul.mubr.f32.gmra.mrb[0].mxu0 %v270
      %v398 = vpop.f32.mrb[0].mxu0
      %v399 = vadd.f32 0.0, %v398
      %v400 = vpop.f32.mrb[0].mxu0
      %v401 = vadd.f32 0.0, %v400
      %402 = vmatprep.mubr.f32.mxu0 0.0
      %403 = vmatmul.mubr.f32.gmra.mrb[0].mxu0 %v273
      %v404 = vpop.f32.mrb[0].mxu0
      %v405 = vadd.f32 0.0, %v404
      %v406 = vpop.f32.mrb[0].mxu0
      %v407 = vadd.f32 0.0, %v406
      %408 = vmatprep.mubr.f32.mxu0 0.0
      %409 = vmatmul.mubr.f32.gmra.mrb[0].mxu0 %v276
      %v410 = vpop.f32.mrb[0].mxu0
      %v411 = vadd.f32 0.0, %v410
      %v412 = vpop.f32.mrb[0].mxu0
      %v413 = vadd.f32 0.0, %v412
      %414 = vmatprep.mubr.f32.mxu0 0.0
      %415 = vmatmul.mubr.f32.gmra.mrb[0].mxu0 %v279
      %v416 = vpop.f32.mrb[0].mxu0
      %v417 = vadd.f32 0.0, %v416
      %v418 = vpop.f32.mrb[0].mxu0
      %v419 = vadd.f32 0.0, %v418
      %420 = vmatprep.mubr.f32.mxu0 0.0
      %421 = vmatmul.mubr.f32.gmra.mrb[0].mxu0 %v282
      %v422 = vpop.f32.mrb[0].mxu0
      %v423 = vadd.f32 0.0, %v422
      %v424 = vpop.f32.mrb[0].mxu0
      %v425 = vadd.f32 0.0, %v424
      %426 = vmatprep.mubr.f32.mxu0 0.0
      %427 = vmatmul.mubr.f32.gmra.mrb[0].mxu0 %v285
      %v428 = vpop.f32.mrb[0].mxu0
      %v429 = vadd.f32 0.0, %v428
      %v430 = vpop.f32.mrb[0].mxu0
      %v431 = vadd.f32 0.0, %v430
      %432 = vmatprep.mubr.f32.mxu0 0.0
      %433 = vmatmul.mubr.f32.gmra.mrb[0].mxu0 %v288
      %v434 = vpop.f32.mrb[0].mxu0
      %v435 = vadd.f32 0.0, %v434
      %v436 = vpop.f32.mrb[0].mxu0
      %v437 = vadd.f32 0.0, %v436
      %438 = vmatprep.mubr.f32.mxu0 0.0
      %439 = vmatmul.mubr.f32.gmra.mrb[0].mxu0 %v291
      %v440 = vpop.f32.mrb[0].mxu0
      %v441 = vadd.f32 0.0, %v440
      %v442 = vpop.f32.mrb[0].mxu0
      %v443 = vadd.f32 0.0, %v442
      %444 = vmatprep.mubr.f32.mxu0 0.0
      %445 = vmatmul.mubr.f32.gmra.mrb[0].mxu0 %v294
      %v446 = vpop.f32.mrb[0].mxu0
      %v447 = vadd.f32 0.0, %v446
      %v448 = vpop.f32.mrb[0].mxu0
      %v449 = vadd.f32 0.0, %v448
      %450 = vmatprep.mubr.f32.mxu0 0.0
      %451 = vmatmul.mubr.f32.gmra.mrb[0].mxu0 %v297
      %v452 = vpop.f32.mrb[0].mxu0
      %v453 = vadd.f32 0.0, %v452
      %v454 = vpop.f32.mrb[0].mxu0
      %v455 = vadd.f32 0.0, %v454
      %456 = vmatprep.mubr.f32.mxu0 0.0
      %457 = vmatmul.mubr.f32.gmra.mrb[0].mxu0 %v300
      %v458 = vpop.f32.mrb[0].mxu0
      %v459 = vadd.f32 0.0, %v458
      %v460 = vpop.f32.mrb[0].mxu0
      %v461 = vadd.f32 0.0, %v460
      %462 = vmatprep.mubr.f32.mxu0 0.0
      %463 = vmatmul.mubr.f32.gmra.mrb[0].mxu0 %v303
      %v464 = vpop.f32.mrb[0].mxu0
      %v465 = vadd.f32 0.0, %v464
      %v466 = vpop.f32.mrb[0].mxu0
      %v467 = vadd.f32 0.0, %v466
      %468 = vmatprep.mubr.f32.mxu0 0.0
      %469 = vmatmul.mubr.f32.gmra.mrb[0].mxu0 %v306
      %v470 = vpop.f32.mrb[0].mxu0
      %v471 = vadd.f32 0.0, %v470
      %v472 = vpop.f32.mrb[0].mxu0
      %v473 = vadd.f32 0.0, %v472
      %474 = vmatprep.mubr.f32.mxu0 0.0
      %475 = vmatmul.mubr.f32.gmra.mrb[0].mxu0 %v309
      %v476 = vpop.f32.mrb[0].mxu0
      %v477 = vadd.f32 0.0, %v476
      %v478 = vpop.f32.mrb[0].mxu0
      %v479 = vadd.f32 0.0, %v478
      %480 = vmatprep.mubr.f32.mxu0 0.0
      %481 = vmatmul.mubr.f32.gmra.mrb[0].mxu0 %v312
      %v482 = vpop.f32.mrb[0].mxu0
      %v483 = vadd.f32 0.0, %v482
      %v484 = vpop.f32.mrb[0].mxu0
      %v485 = vadd.f32 0.0, %v484
      %486 = vdwg.mxu0
      %v487 = vld [vmem:[%s2] sm:$0xff]
      %v488 = vld [vmem:[%s2 + $0x8] sm:$0xff]
      %v489 = vld [vmem:[%s2 + $0x10] sm:$0xff]
      %v490 = vld [vmem:[%s2 + $0x18] sm:$0xff]
      %v491 = vld [vmem:[%s2 + $0x20] sm:$0xff]
      %v492 = vld [vmem:[%s2 + $0x28] sm:$0xff]
      %v493 = vld [vmem:[%s2 + $0x30] sm:$0xff]
      %v494 = vld [vmem:[%s2 + $0x38] sm:$0xff]
      %v495 = vld [vmem:[%s2 + $0x40] sm:$0xff]
      %v496 = vld [vmem:[%s2 + $0x48] sm:$0xff]
      %v497 = vld [vmem:[%s2 + $0x50] sm:$0xff]
      %v498 = vld [vmem:[%s2 + $0x58] sm:$0xff]
      %v499 = vld [vmem:[%s2 + $0x60] sm:$0xff]
      %v500 = vld [vmem:[%s2 + $0x68] sm:$0xff]
      %v501 = vld [vmem:[%s2 + $0x70] sm:$0xff]
      %v502 = vld [vmem:[%s2 + $0x78] sm:$0xff]
      %v503 = vld [vmem:[%s2 + $0x80] sm:$0xff]
      %v504 = vld [vmem:[%s2 + $0x88] sm:$0xff]
      %v505 = vadd.f32 %v381, %v383
      %506 = vadd.xlane.f32.xlu0 %v505
      %v507 = vpop.xlane.xlu0 %506
      %v508 = vadd.f32 %v387, %v389
      %509 = vadd.xlane.f32.xlu0 %v508
      %v510 = vpop.xlane.xlu0 %509
      %v511 = vadd.f32 %v393, %v395
      %512 = vadd.xlane.f32.xlu0 %v511
      %v513 = vpop.xlane.xlu0 %512
      %v514 = vadd.f32 %v399, %v401
      %515 = vadd.xlane.f32.xlu0 %v514
      %v516 = vpop.xlane.xlu0 %515
      %v517 = vadd.f32 %v405, %v407
      %518 = vadd.xlane.f32.xlu0 %v517
      %v519 = vpop.xlane.xlu0 %518
      %v520 = vadd.f32 %v411, %v413
      %521 = vadd.xlane.f32.xlu0 %v520
      %v522 = vpop.xlane.xlu0 %521
      %v523 = vadd.f32 %v417, %v419
      %524 = vadd.xlane.f32.xlu0 %v523
      %v525 = vpop.xlane.xlu0 %524
      %v526 = vadd.f32 %v423, %v425
      %527 = vadd.xlane.f32.xlu0 %v526
      %v528 = vpop.xlane.xlu0 %527
      %v529 = vadd.f32 %v429, %v431
      %530 = vadd.xlane.f32.xlu0 %v529
      %v531 = vpop.xlane.xlu0 %530
      %v532 = vadd.f32 %v435, %v437
      %533 = vadd.xlane.f32.xlu0 %v532
      %v534 = vpop.xlane.xlu0 %533
      %v535 = vadd.f32 %v441, %v443
      %536 = vadd.xlane.f32.xlu0 %v535
      %v537 = vpop.xlane.xlu0 %536
      %v538 = vadd.f32 %v447, %v449
      %539 = vadd.xlane.f32.xlu0 %v538
      %v540 = vpop.xlane.xlu0 %539
      %v541 = vadd.f32 %v453, %v455
      %542 = vadd.xlane.f32.xlu0 %v541
      %v543 = vpop.xlane.xlu0 %542
      %v544 = vadd.f32 %v459, %v461
      %545 = vadd.xlane.f32.xlu0 %v544
      %v546 = vpop.xlane.xlu0 %545
      %v547 = vadd.f32 %v465, %v467
      %548 = vadd.xlane.f32.xlu0 %v547
      %v549 = vpop.xlane.xlu0 %548
      %v550 = vadd.f32 %v471, %v473
      %551 = vadd.xlane.f32.xlu0 %v550
      %v552 = vpop.xlane.xlu0 %551
      %v553 = vadd.f32 %v477, %v479
      %554 = vadd.xlane.f32.xlu0 %v553
      %v555 = vpop.xlane.xlu0 %554
      %v556 = vadd.f32 %v483, %v485
      %557 = vadd.xlane.f32.xlu0 %v556
      %v558 = vpop.xlane.xlu0 %557
      %v559 = vadd.f32 %v487, %v507
      %v560 = vadd.f32 %v488, %v510
      %v561 = vadd.f32 %v489, %v513
      %v562 = vadd.f32 %v490, %v516
      %v563 = vadd.f32 %v491, %v519
      %v564 = vadd.f32 %v492, %v522
      %v565 = vadd.f32 %v493, %v525
      %v566 = vadd.f32 %v494, %v528
      %v567 = vadd.f32 %v495, %v531
      %v568 = vadd.f32 %v496, %v534
      %v569 = vadd.f32 %v497, %v537
      %v570 = vadd.f32 %v498, %v540
      %v571 = vadd.f32 %v499, %v543
      %v572 = vadd.f32 %v500, %v546
      %v573 = vadd.f32 %v501, %v549
      %v574 = vadd.f32 %v502, %v552
      %v575 = vadd.f32 %v503, %v555
      %v576 = vadd.f32 %v504, %v558
      %vm577 = vcmask 7168
      %578 = vst.msk [vmem:[%s2] sm:$0xff] %vm577, %v559
      %579 = vst.msk [vmem:[%s2 + $0x8] sm:$0xff] %vm577, %v560
      %580 = vst.msk [vmem:[%s2 + $0x10] sm:$0xff] %vm577, %v561
      %581 = vst.msk [vmem:[%s2 + $0x18] sm:$0xff] %vm577, %v562
      %582 = vst.msk [vmem:[%s2 + $0x20] sm:$0xff] %vm577, %v563
      %583 = vst.msk [vmem:[%s2 + $0x28] sm:$0xff] %vm577, %v564
      %584 = vst.msk [vmem:[%s2 + $0x30] sm:$0xff] %vm577, %v565
      %585 = vst.msk [vmem:[%s2 + $0x38] sm:$0xff] %vm577, %v566
      %586 = vst.msk [vmem:[%s2 + $0x40] sm:$0xff] %vm577, %v567
      %587 = vst.msk [vmem:[%s2 + $0x48] sm:$0xff] %vm577, %v568
      %588 = vst.msk [vmem:[%s2 + $0x50] sm:$0xff] %vm577, %v569
      %589 = vst.msk [vmem:[%s2 + $0x58] sm:$0xff] %vm577, %v570
      %590 = vst.msk [vmem:[%s2 + $0x60] sm:$0xff] %vm577, %v571
      %591 = vst.msk [vmem:[%s2 + $0x68] sm:$0xff] %vm577, %v572
      %592 = vst.msk [vmem:[%s2 + $0x70] sm:$0xff] %vm577, %v573
      %593 = vst.msk [vmem:[%s2 + $0x78] sm:$0xff] %vm577, %v574
      %594 = vst.msk [vmem:[%s2 + $0x80] sm:$0xff] %vm577, %v575
      %595 = vst.msk [vmem:[%s2 + $0x88] sm:$0xff] %vm577, %v576
      %v596 = vld [vmem:[%s3] sm:$0xff]
      %v597 = vld [vmem:[%s3 + $0x8] sm:$0xff]
      %v598 = vld [vmem:[%s3 + $0x10] sm:$0xff]
      %v599 = vld [vmem:[%s3 + $0x18] sm:$0xff]
      %v600 = vld [vmem:[%s3 + $0x20] sm:$0xff]
      %v601 = vld [vmem:[%s3 + $0x28] sm:$0xff]
      %v602 = vld [vmem:[%s3 + $0x30] sm:$0xff]
      %v603 = vld [vmem:[%s3 + $0x38] sm:$0xff]
      %v604 = vld [vmem:[%s3 + $0x40] sm:$0xff]
      %v605 = vld [vmem:[%s3 + $0x48] sm:$0xff]
      %v606 = vld [vmem:[%s3 + $0x50] sm:$0xff]
      %v607 = vld [vmem:[%s3 + $0x58] sm:$0xff]
      %v608 = vld [vmem:[%s3 + $0x60] sm:$0xff]
      %v609 = vld [vmem:[%s3 + $0x68] sm:$0xff]
      %v610 = vld [vmem:[%s3 + $0x70] sm:$0xff]
      %v611 = vld [vmem:[%s3 + $0x78] sm:$0xff]
      %v612 = vld [vmem:[%s3 + $0x80] sm:$0xff]
      %v613 = vld [vmem:[%s3 + $0x88] sm:$0xff]
      %v614 = vmul.f32 %v381, %v381
      %v615 = vmul.f32 %v383, %v383
      %v616 = vmul.f32 %v387, %v387
      %v617 = vmul.f32 %v389, %v389
      %v618 = vmul.f32 %v393, %v393
      %v619 = vmul.f32 %v395, %v395
      %v620 = vmul.f32 %v399, %v399
      %v621 = vmul.f32 %v401, %v401
      %v622 = vmul.f32 %v405, %v405
      %v623 = vmul.f32 %v407, %v407
      %v624 = vmul.f32 %v411, %v411
      %v625 = vmul.f32 %v413, %v413
      %v626 = vmul.f32 %v417, %v417
      %v627 = vmul.f32 %v419, %v419
      %v628 = vmul.f32 %v423, %v423
      %v629 = vmul.f32 %v425, %v425
      %v630 = vmul.f32 %v429, %v429
      %v631 = vmul.f32 %v431, %v431
      %v632 = vmul.f32 %v435, %v435
      %v633 = vmul.f32 %v437, %v437
      %v634 = vmul.f32 %v441, %v441
      %v635 = vmul.f32 %v443, %v443
      %v636 = vmul.f32 %v447, %v447
      %v637 = vmul.f32 %v449, %v449
      %v638 = vmul.f32 %v453, %v453
      %v639 = vmul.f32 %v455, %v455
      %v640 = vmul.f32 %v459, %v459
      %v641 = vmul.f32 %v461, %v461
      %v642 = vmul.f32 %v465, %v465
      %v643 = vmul.f32 %v467, %v467
      %v644 = vmul.f32 %v471, %v471
      %v645 = vmul.f32 %v473, %v473
      %v646 = vmul.f32 %v477, %v477
      %v647 = vmul.f32 %v479, %v479
      %v648 = vmul.f32 %v483, %v483
      %v649 = vmul.f32 %v485, %v485
      %v650 = vadd.f32 %v614, %v615
      %651 = vadd.xlane.f32.xlu0 %v650
      %v652 = vpop.xlane.xlu0 %651
      %v653 = vadd.f32 %v616, %v617
      %654 = vadd.xlane.f32.xlu0 %v653
      %v655 = vpop.xlane.xlu0 %654
      %v656 = vadd.f32 %v618, %v619
      %657 = vadd.xlane.f32.xlu0 %v656
      %v658 = vpop.xlane.xlu0 %657
      %v659 = vadd.f32 %v620, %v621
      %660 = vadd.xlane.f32.xlu0 %v659
      %v661 = vpop.xlane.xlu0 %660
      %v662 = vadd.f32 %v622, %v623
      %663 = vadd.xlane.f32.xlu0 %v662
      %v664 = vpop.xlane.xlu0 %663
      %v665 = vadd.f32 %v624, %v625
      %666 = vadd.xlane.f32.xlu0 %v665
      %v667 = vpop.xlane.xlu0 %666
      %v668 = vadd.f32 %v626, %v627
      %669 = vadd.xlane.f32.xlu0 %v668
      %v670 = vpop.xlane.xlu0 %669
      %v671 = vadd.f32 %v628, %v629
      %672 = vadd.xlane.f32.xlu0 %v671
      %v673 = vpop.xlane.xlu0 %672
      %v674 = vadd.f32 %v630, %v631
      %675 = vadd.xlane.f32.xlu0 %v674
      %v676 = vpop.xlane.xlu0 %675
      %v677 = vadd.f32 %v632, %v633
      %678 = vadd.xlane.f32.xlu0 %v677
      %v679 = vpop.xlane.xlu0 %678
      %v680 = vadd.f32 %v634, %v635
      %681 = vadd.xlane.f32.xlu0 %v680
      %v682 = vpop.xlane.xlu0 %681
      %v683 = vadd.f32 %v636, %v637
      %684 = vadd.xlane.f32.xlu0 %v683
      %v685 = vpop.xlane.xlu0 %684
      %v686 = vadd.f32 %v638, %v639
      %687 = vadd.xlane.f32.xlu0 %v686
      %v688 = vpop.xlane.xlu0 %687
      %v689 = vadd.f32 %v640, %v641
      %690 = vadd.xlane.f32.xlu0 %v689
      %v691 = vpop.xlane.xlu0 %690
      %v692 = vadd.f32 %v642, %v643
      %693 = vadd.xlane.f32.xlu0 %v692
      %v694 = vpop.xlane.xlu0 %693
      %v695 = vadd.f32 %v644, %v645
      %696 = vadd.xlane.f32.xlu0 %v695
      %v697 = vpop.xlane.xlu0 %696
      %v698 = vadd.f32 %v646, %v647
      %699 = vadd.xlane.f32.xlu0 %v698
      %v700 = vpop.xlane.xlu0 %699
      %v701 = vadd.f32 %v648, %v649
      %702 = vadd.xlane.f32.xlu0 %v701
      %v703 = vpop.xlane.xlu0 %702
      %v704 = vadd.f32 %v596, %v652
      %v705 = vadd.f32 %v597, %v655
      %v706 = vadd.f32 %v598, %v658
      %v707 = vadd.f32 %v599, %v661
      %v708 = vadd.f32 %v600, %v664
      %v709 = vadd.f32 %v601, %v667
      %v710 = vadd.f32 %v602, %v670
      %v711 = vadd.f32 %v603, %v673
      %v712 = vadd.f32 %v604, %v676
      %v713 = vadd.f32 %v605, %v679
      %v714 = vadd.f32 %v606, %v682
      %v715 = vadd.f32 %v607, %v685
      %v716 = vadd.f32 %v608, %v688
      %v717 = vadd.f32 %v609, %v691
      %v718 = vadd.f32 %v610, %v694
      %v719 = vadd.f32 %v611, %v697
      %v720 = vadd.f32 %v612, %v700
      %v721 = vadd.f32 %v613, %v703
      %722 = vst.msk [vmem:[%s3] sm:$0xff] %vm577, %v704
      %723 = vst.msk [vmem:[%s3 + $0x8] sm:$0xff] %vm577, %v705
      %724 = vst.msk [vmem:[%s3 + $0x10] sm:$0xff] %vm577, %v706
      %725 = vst.msk [vmem:[%s3 + $0x18] sm:$0xff] %vm577, %v707
      %726 = vst.msk [vmem:[%s3 + $0x20] sm:$0xff] %vm577, %v708
      %727 = vst.msk [vmem:[%s3 + $0x28] sm:$0xff] %vm577, %v709
      %728 = vst.msk [vmem:[%s3 + $0x30] sm:$0xff] %vm577, %v710
      %729 = vst.msk [vmem:[%s3 + $0x38] sm:$0xff] %vm577, %v711
      %730 = vst.msk [vmem:[%s3 + $0x40] sm:$0xff] %vm577, %v712
      %731 = vst.msk [vmem:[%s3 + $0x48] sm:$0xff] %vm577, %v713
      %732 = vst.msk [vmem:[%s3 + $0x50] sm:$0xff] %vm577, %v714
      %733 = vst.msk [vmem:[%s3 + $0x58] sm:$0xff] %vm577, %v715
      %734 = vst.msk [vmem:[%s3 + $0x60] sm:$0xff] %vm577, %v716
      %735 = vst.msk [vmem:[%s3 + $0x68] sm:$0xff] %vm577, %v717
      %736 = vst.msk [vmem:[%s3 + $0x70] sm:$0xff] %vm577, %v718
      %737 = vst.msk [vmem:[%s3 + $0x78] sm:$0xff] %vm577, %v719
      %738 = vst.msk [vmem:[%s3 + $0x80] sm:$0xff] %vm577, %v720
      %739 = vst.msk [vmem:[%s3 + $0x88] sm:$0xff] %vm577, %v721
      // Predicated region
      $region33: #{tpu_custom_call.1} parent=27 // pred_check
        %p740 = pneg %p89
      $region34: #{tpu_custom_call.1} parent=27 // pred_check_branch
        %742 = sbr.rel (%p740) target = $region36
      $region35: #{tpu_custom_call.1} parent=27 // pred_region
        _
      $region36: #{tpu_custom_call.1} parent=27 // pred_fallthru
        _
      // Predicated region
      $region37: #{tpu_custom_call.1} parent=27 // pred_check
        %p743 = pneg %p110
      $region38: #{tpu_custom_call.1} parent=27 // pred_check_branch
        %745 = sbr.rel (%p743) target = $region40
      $region39: #{tpu_custom_call.1} parent=27 // pred_region
        _
      $region40: #{tpu_custom_call.1} parent=27 // pred_fallthru
        _
      // Predicated region
      $region41: #{tpu_custom_call.1} parent=27 // pred_check
        %p746 = pneg %p89
      $region42: #{tpu_custom_call.1} parent=27 // pred_check_branch
        %748 = sbr.rel (%p746) target = $region44
      $region43: #{tpu_custom_call.1} parent=27 // pred_region
        _
      $region44: #{tpu_custom_call.1} parent=27 // pred_fallthru
        _
      // Predicated region
      $region45: #{tpu_custom_call.1} parent=27 // pred_check
        %p749 = pneg %p110
      $region46: #{tpu_custom_call.1} parent=27 // pred_check_branch
        %751 = sbr.rel (%p749) target = $region48
      $region47: #{tpu_custom_call.1} parent=27 // pred_region
        _
      $region48: #{tpu_custom_call.1} parent=27 // pred_fallthru
        _
    $region28: #{tpu_custom_call.1} parent=5 // pred_fallthru
      _
    %p752 = scmp.le.s32.totalorder 2, %s10
    // Predicated region
    $region49: #{tpu_custom_call.1} parent=5 // pred_check
      %p753 = pneg %p752
    $region50: #{tpu_custom_call.1} parent=5 // pred_check_branch
      %755 = sbr.rel (%p753) target = $region52
    $region51: #{tpu_custom_call.1} parent=5 // pred_region
      %s756 = ssub.s32 %s10, 2
    $region52: #{tpu_custom_call.1} parent=5 // pred_fallthru
      _
  $region6: #{tpu_custom_call.1} parent=0 // loop_footer
    %s14 = sadd.s32 1, %s10
  $region7: #{tpu_custom_call.1} parent=0 // loop_footer_branch
    %9 = sbr.rel target = $region3
  $region8: #{tpu_custom_call.1} parent=0 // loop_exit
    _

</llo_original>
